<compile_context>
chip_gen: v6e
topology: v6e:2x2x1
jax: 0.10.0
libtpu: 0.0.40
codegen_flags: <defaults>
</compile_context>

<pallas_src>
import functools

import numpy as np
import jax
import jax.numpy as jnp
from jax.experimental import pallas as pl
from jax.experimental.pallas import tpu as pltpu


def _round_up(v, m):
    return ((v + m - 1) // m) * m


def _knn_fused_kernel(k, tb_ref,
                      pos_skip_ref, bskip_ref, pos_t_ref, batch_ref,
                      xw_ref, x_skip_ref, w2_ref, bias_ref,
                      h_ref, stats_ref):
    """One fine-point tile vs. its batch's coarse window:
       kNN selection + fused (interp@W1 + x_skip@W2 + b) + ReLU + BN partials."""
    del tb_ref                                    # only used by the index_maps
    ps = pos_skip_ref[...]                        # (T, 8)  fine coords (zero-padded)
    bs = bskip_ref[...]                           # (T, 1)  int32 (-2 = padding row)
    p_t = pos_t_ref[...]                          # (8, Nc) coarse coords^T window
    b = batch_ref[...]                            # (1, Nc) int32 (-1 = padding col)
    xw = xw_ref[...]                              # (Nc, Hp) coarse features @ W1
    xs = x_skip_ref[...]                          # (T, Cs)  skip features
    w2 = w2_ref[...]                              # (Cs, Hp)
    bias = bias_ref[...]                          # (1, Hp)

    # pairwise squared distances on the (otherwise idle) MXU:
    # d2 = |a|^2 + |b|^2 - 2 a.b, clamped at 0 against cancellation.
    cross = jnp.dot(ps, p_t, preferred_element_type=jnp.float32)      # (T, Nc)
    ps2 = jnp.sum(ps * ps, axis=1, keepdims=True)                     # (T, 1)
    p2 = jnp.sum(p_t * p_t, axis=0, keepdims=True)                    # (1, Nc)
    d2 = jnp.maximum(ps2 + p2 - 2.0 * cross, 0.0)

    inf = jnp.float32(jnp.inf)
    d2 = jnp.where(bs == b, d2, inf)              # mask cross-batch / padding pairs

    wsel = jnp.zeros_like(d2)                     # weighted neighbor-selection matrix
    wsum = jnp.zeros_like(ps2)
    # k is small & static -> unrolled; ONE gather matmul after the loop.
    # Exact-tie distances split their weight (identical when distances distinct).
    for _ in range(k):
        dmin = jnp.min(d2, axis=1, keepdims=True)
        hit = d2 == dmin
        hitf = hit.astype(jnp.float32)
        cnt = jnp.sum(hitf, axis=1, keepdims=True)
        w = 1.0 / (dmin + 1e-16)                  # 1/inf -> 0 when row exhausted
        wsel = wsel + (w / cnt) * hitf
        wsum = wsum + w
        d2 = jnp.where(hit, inf, d2)              # drop chosen neighbor(s)

    inv_wsum = jnp.where(wsum > 0.0, 1.0 / wsum, 0.0)   # guard empty-batch rows

    # fused:  interp @ W1 + x_skip @ W2 + b   (W1 pre-folded into xw), then ReLU
    h = (jnp.dot(wsel, xw, preferred_element_type=jnp.float32) * inv_wsum
         + jnp.dot(xs, w2, preferred_element_type=jnp.float32) + bias)
    h = jnp.maximum(h, 0.0)
    h_ref[...] = h

    # per-tile BatchNorm partial sums (padded fine rows masked out); rows 2..7 of
    # the stats block are never read by the epilogue.
    valid = (bs >= 0).astype(jnp.float32)                 # (T, 1)
    hv = h * valid
    stats_ref[0, 0:1, :] = jnp.sum(hv, axis=0, keepdims=True)
    stats_ref[0, 1:2, :] = jnp.sum(hv * hv, axis=0, keepdims=True)


def fp_module_forward(params, x, pos, batch, x_skip, pos_skip, batch_skip, k,
                      num_batches=None, ns_tile_cap=512):
    """FPModule.forward: knn_interpolate -> cat(x_skip) -> Lin + ReLU + BatchNorm1d.

    Host-side planning (per-batch padded layout, tile sizes) needs concrete batch
    vectors, so call eagerly.  Assumes `batch` / `batch_skip` are sorted (as
    torch_geometric batching produces).  Returns (out, pos_skip, batch_skip)."""
    n, cx = x.shape
    ns = pos_skip.shape[0]

    batch_np = np.asarray(batch).astype(np.int64)
    bskip_np = np.asarray(batch_skip).astype(np.int64)
    if num_batches is None:
        num_batches = int(max(batch_np.max(), bskip_np.max())) + 1
    nb = int(num_batches)

    W = params["W"].astype(jnp.float32)           # (H, Cx+Cs)  torch Linear layout
    bvec = params["b"].astype(jnp.float32)
    gamma = params["gamma"].astype(jnp.float32)
    beta = params["beta"].astype(jnp.float32)
    h_dim = W.shape[0]
    # lane-dense hidden dim; multiples of 256 fill the v6e/v7x MXU when H > 128
    hp = 128 if h_dim <= 128 else _round_up(h_dim, 256)

    # split Linear:  x_cat @ W.T = interp @ W[:, :Cx].T + x_skip @ W[:, Cx:].T
    w1 = jnp.zeros((cx, hp), jnp.float32).at[:, :h_dim].set(W[:, :cx].T)
    if x_skip is None:
        cs = 1
        x_skip_eff = jnp.zeros((ns, 1), jnp.float32)
        w2 = jnp.zeros((1, hp), jnp.float32)
    else:
        cs = x_skip.shape[1]
        x_skip_eff = x_skip.astype(jnp.float32)
        w2 = jnp.zeros((cs, hp), jnp.float32).at[:, :h_dim].set(W[:, cx:].T)
    bias_p = jnp.zeros((1, hp), jnp.float32).at[0, :h_dim].set(bvec)

    # fold W1 into the coarse features once: ((wsel/wsum)@x)@W1 == (wsel/wsum)@(x@W1)
    xw = jnp.dot(x.astype(jnp.float32), w1)       # (N, Hp)

    # ---- per-batch coarse windows: each batch gets its own lane-aligned column block
    counts_c = np.bincount(batch_np, minlength=nb)
    off_c = np.concatenate([[0], np.cumsum(counts_c)[:-1]])
    nc_pad = int(max(_round_up(int(counts_c.max()), 128), 128))
    dest_c = jnp.asarray(batch_np * nc_pad + (np.arange(n) - off_c[batch_np]),
                         jnp.int32)
    xw_pad = jnp.zeros((nb * nc_pad, hp), jnp.float32).at[dest_c].set(xw)
    pos_c = jnp.zeros((nb * nc_pad, 3), jnp.float32).at[dest_c].set(
        pos.astype(jnp.float32))
    pos_t_pad = jnp.zeros((8, nb * nc_pad), jnp.float32).at[:3].set(pos_c.T)
    batch_row = jnp.full((1, nb * nc_pad), -1, jnp.int32).at[0, dest_c].set(
        batch.astype(jnp.int32))

    # ---- fine-point tiling: VMEM-aware tile size, batches padded to whole tiles
    counts_f = np.bincount(bskip_np, minlength=nb)
    # ~8 live (T, Nc) f32 temporaries + double-buffered coarse window must stay
    # well under the smallest per-core VMEM (v7x: 64 MiB per TensorCore).
    budget = 24 << 20
    resident = 2 * nc_pad * hp * 4 + 4 * 8 * nc_pad * 4
    per_row = 8 * nc_pad * 4 + 2 * hp * 4
    t_budget = (budget - resident) // per_row if budget > resident else 8
    t = int(min(ns_tile_cap, _round_up(max(int(counts_f.max()), 1), 8), t_budget))
    t = max(8, (t // 8) * 8)

    counts_f_pad = ((counts_f + t - 1) // t) * t
    tiles_per_batch = counts_f_pad // t
    num_tiles = int(tiles_per_batch.sum())
    extra = num_tiles % 2                          # even tile count for v7x megacore
    num_tiles += extra
    ns_pad = num_tiles * t

    off_f = np.concatenate([[0], np.cumsum(counts_f)[:-1]])
    off_fp = np.concatenate([[0], np.cumsum(counts_f_pad)[:-1]])
    dest_f = jnp.asarray(off_fp[bskip_np] + (np.arange(ns) - off_f[bskip_np]),
                         jnp.int32)
    tile_batch_np = np.repeat(np.arange(nb), tiles_per_batch)
    if extra:
        tile_batch_np = np.concatenate([tile_batch_np, [0]])
    tile_batch = jnp.asarray(tile_batch_np, jnp.int32)

    pos_s = jnp.zeros((ns_pad, 3), jnp.float32).at[dest_f].set(
        pos_skip.astype(jnp.float32))
    pos_s_pad = jnp.pad(pos_s, ((0, 0), (0, 5)))   # coordinate dim -> 8 (aligned K)
    bskip_pad = jnp.full((ns_pad, 1), -2, jnp.int32).at[dest_f, 0].set(
        batch_skip.astype(jnp.int32))
    x_skip_pad = jnp.zeros((ns_pad, cs), jnp.float32).at[dest_f].set(x_skip_eff)

    # explicit scoped-VMEM budget (defaults are only 16 MiB v5e / 32 MiB v6e,v7x)
    vmem_bytes = (
        2 * (t * 128 * 4) * 2                 # pos_skip + batch_skip tiles
        + 2 * (8 * nc_pad * 4) * 2            # pos^T + batch windows
        + 2 * (nc_pad * hp * 4)               # x@W1 window
        + 2 * (t * _round_up(cs, 128) * 4)    # x_skip tile
        + 2 * (_round_up(cs, 8) * hp * 4)     # W2
        + 2 * (8 * hp * 4) * 2                # bias + stats
        + 2 * (t * hp * 4)                    # h tile
        + 8 * t * nc_pad * 4                  # in-kernel (T, Nc) temporaries
        + (8 << 20))                          # headroom
    vmem_limit = int(min(max(vmem_bytes, 32 << 20), 100 << 20))

    kern = functools.partial(_knn_fused_kernel, k)
    h_pre, stats = pl.pallas_call(
        kern,
        out_shape=(jax.ShapeDtypeStruct((ns_pad, hp), jnp.float32),
                   jax.ShapeDtypeStruct((num_tiles, 8, hp), jnp.float32)),
        grid_spec=pltpu.PrefetchScalarGridSpec(
            num_scalar_prefetch=1,
            grid=(num_tiles,),
            in_specs=[
                pl.BlockSpec((t, 8), lambda i, tb: (i, 0)),            # fine coords
                pl.BlockSpec((t, 1), lambda i, tb: (i, 0)),            # fine batch
                pl.BlockSpec((8, nc_pad), lambda i, tb: (0, tb[i])),   # coarse coords^T
                pl.BlockSpec((1, nc_pad), lambda i, tb: (0, tb[i])),   # coarse batch
                pl.BlockSpec((nc_pad, hp), lambda i, tb: (tb[i], 0)),  # x@W1 window
                pl.BlockSpec((t, cs), lambda i, tb: (i, 0)),           # skip features
                pl.BlockSpec((cs, hp), lambda i, tb: (0, 0)),          # W2 (resident)
                pl.BlockSpec((1, hp), lambda i, tb: (0, 0)),           # bias (resident)
            ],
            out_specs=(pl.BlockSpec((t, hp), lambda i, tb: (i, 0)),
                       pl.BlockSpec((1, 8, hp), lambda i, tb: (i, 0, 0))),
        ),
        compiler_params=pltpu.CompilerParams(
            dimension_semantics=("parallel",),
            vmem_limit_bytes=vmem_limit),
    )(tile_batch, pos_s_pad, bskip_pad, pos_t_pad, batch_row,
      xw_pad, x_skip_pad, w2, bias_p)

    # ---- BatchNorm1d (training stats) from per-tile partials + fused jnp epilogue.
    # Affine + row gather (undo per-batch padding) + column slice stay in plain jnp:
    # XLA fuses them into one pass that touches only the h_dim valid columns.
    tot = jnp.sum(stats[:, :2, :], axis=0)                   # (2, Hp)
    mean = tot[0:1] / ns
    var = tot[1:2] / ns - mean * mean                        # biased (training mode)
    inv_std = jax.lax.rsqrt(var + 1e-5)
    gamma_p = jnp.zeros((1, hp), jnp.float32).at[0, :h_dim].set(gamma)
    beta_p = jnp.zeros((1, hp), jnp.float32).at[0, :h_dim].set(beta)
    scale = (gamma_p * inv_std)[:, :h_dim]
    shift = (beta_p - mean * gamma_p * inv_std)[:, :h_dim]
    out = h_pre[dest_f, :h_dim] * scale + shift              # original row order

    return out, pos_skip, batch_skip


def fp_module_reference(params, x, pos, batch, x_skip, pos_skip, batch_skip, k):
    """Pure-JAX reference mirroring torch_geometric knn_interpolate + MLP block."""
    d2 = jnp.sum((pos_skip[:, None, :] - pos[None, :, :]) ** 2, axis=-1)
    d2 = jnp.where(batch_skip[:, None] == batch[None, :], d2, jnp.inf)
    neg_d, idx = jax.lax.top_k(-d2, k)
    dist = -neg_d
    w = 1.0 / (dist + 1e-16)
    feats = x[idx]                                        # (Ns, k, Cx)
    y = jnp.sum(w[..., None] * feats, axis=1) / jnp.sum(w, axis=1, keepdims=True)
    xc = y if x_skip is None else jnp.concatenate([y, x_skip], axis=1)
    h = jnp.maximum(xc @ params["W"].T + params["b"], 0.0)
    mean = h.mean(axis=0, keepdims=True)
    var = ((h - mean) ** 2).mean(axis=0, keepdims=True)
    return (h - mean) / jnp.sqrt(var + 1e-5) * params["gamma"] + params["beta"]


if __name__ == "__main__":
    key = jax.random.PRNGKey(0)
    k_x, k_pos, k_pskip, k_xskip, k_w, k_b, k_g = jax.random.split(key, 7)

    N, Ns = 8, 16              # coarse points, fine (skip-connection) points
    Cx, Cskip, H, K, B = 4, 4, 32, 3, 2

    x = jax.random.normal(k_x, (N, Cx), jnp.float32)
    pos = jax.random.normal(k_pos, (N, 3), jnp.float32)
    pos_skip = jax.random.normal(k_pskip, (Ns, 3), jnp.float32)
    x_skip = jax.random.normal(k_xskip, (Ns, Cskip), jnp.float32)
    batch = jnp.repeat(jnp.arange(B, dtype=jnp.int32), N // B)
    batch_skip = jnp.repeat(jnp.arange(B, dtype=jnp.int32), Ns // B)

    # deterministic parameter init for self.nn = Seq(Lin(Cx+Cskip, H), ReLU, BN(H))
    params = {
        "W": 0.1 * jax.random.normal(k_w, (H, Cx + Cskip), jnp.float32),
        "b": 0.1 * jax.random.normal(k_b, (H,), jnp.float32),
        "gamma": 1.0 + 0.1 * jax.random.normal(k_g, (H,), jnp.float32),
        "beta": jnp.zeros((H,), jnp.float32),
    }

    out, pos_out, batch_out = fp_module_forward(
        params, x, pos, batch, x_skip, pos_skip, batch_skip, K)
    out = jax.block_until_ready(out)

    ref = fp_module_reference(params, x, pos, batch, x_skip, pos_skip, batch_skip, K)
    assert out.shape == (Ns, H)
    assert jnp.allclose(out, ref, rtol=1e-4, atol=1e-4), \
        float(jnp.max(jnp.abs(out - ref)))
    print("KERNEL_OK")
</pallas_src>

<mosaic_0001>
module attributes {stable_mosaic.version = 11 : i64} {
  func.func @_knn_fused_kernel(%arg0: i32, %arg1: memref<2xi32, #tpu.memory_space<smem>>, %arg2: memref<8x8xf32, #tpu.memory_space<vmem>>, %arg3: memref<8x1xi32, #tpu.memory_space<vmem>>, %arg4: memref<8x128xf32, #tpu.memory_space<vmem>>, %arg5: memref<1x128xi32, #tpu.memory_space<vmem>>, %arg6: memref<128x128xf32, #tpu.memory_space<vmem>>, %arg7: memref<8x4xf32, #tpu.memory_space<vmem>>, %arg8: memref<4x128xf32, #tpu.memory_space<vmem>>, %arg9: memref<1x128xf32, #tpu.memory_space<vmem>>, %arg10: memref<8x128xf32, #tpu.memory_space<vmem>>, %arg11: memref<1x8x128xf32, #tpu.memory_space<vmem>>) attributes {dimension_semantics = [#tpu.dimension_semantics<parallel>], iteration_bounds = array<i64: 2>, scalar_prefetch = 1 : i64, scratch_operands = 0 : i64, tpu.core_type = #tpu.core_type<tc>, window_params = [{transform_indices = @transform_0, window_bounds = array<i64: 8, 8>}, {transform_indices = @transform_1, window_bounds = array<i64: 8, 1>}, {transform_indices = @transform_2, window_bounds = array<i64: 8, 128>}, {transform_indices = @transform_3, window_bounds = array<i64: 1, 128>}, {transform_indices = @transform_4, window_bounds = array<i64: 128, 128>}, {transform_indices = @transform_5, window_bounds = array<i64: 8, 4>}, {pipeline_mode = #tpu.pipeline_mode<synchronous>, transform_indices = @transform_6, window_bounds = array<i64: 4, 128>}, {pipeline_mode = #tpu.pipeline_mode<synchronous>, transform_indices = @transform_7, window_bounds = array<i64: 1, 128>}, {transform_indices = @transform_8, window_bounds = array<i64: 8, 128>}, {transform_indices = @transform_9, window_bounds = array<i64: 1, 8, 128>}]} {
    %c0 = arith.constant 0 : index
    %c0_0 = arith.constant 0 : index
    %0 = vector.load %arg2[%c0, %c0_0] : memref<8x8xf32, #tpu.memory_space<vmem>>, vector<8x8xf32>
    %c0_1 = arith.constant 0 : index
    %c0_2 = arith.constant 0 : index
    %1 = vector.load %arg3[%c0_1, %c0_2] : memref<8x1xi32, #tpu.memory_space<vmem>>, vector<8x1xi32>
    %c0_3 = arith.constant 0 : index
    %c0_4 = arith.constant 0 : index
    %2 = vector.load %arg4[%c0_3, %c0_4] : memref<8x128xf32, #tpu.memory_space<vmem>>, vector<8x128xf32>
    %c0_5 = arith.constant 0 : index
    %c0_6 = arith.constant 0 : index
    %3 = vector.load %arg5[%c0_5, %c0_6] : memref<1x128xi32, #tpu.memory_space<vmem>>, vector<1x128xi32>
    %c0_7 = arith.constant 0 : index
    %c0_8 = arith.constant 0 : index
    %4 = vector.load %arg6[%c0_7, %c0_8] : memref<128x128xf32, #tpu.memory_space<vmem>>, vector<128x128xf32>
    %c0_9 = arith.constant 0 : index
    %c0_10 = arith.constant 0 : index
    %5 = vector.load %arg7[%c0_9, %c0_10] : memref<8x4xf32, #tpu.memory_space<vmem>>, vector<8x4xf32>
    %c0_11 = arith.constant 0 : index
    %c0_12 = arith.constant 0 : index
    %6 = vector.load %arg8[%c0_11, %c0_12] : memref<4x128xf32, #tpu.memory_space<vmem>>, vector<4x128xf32>
    %c0_13 = arith.constant 0 : index
    %c0_14 = arith.constant 0 : index
    %7 = vector.load %arg9[%c0_13, %c0_14] : memref<1x128xf32, #tpu.memory_space<vmem>>, vector<1x128xf32>
    %cst = arith.constant dense<0.000000e+00> : vector<8x128xf32>
    %8 = tpu.matmul %0, %2, %cst {dimension_numbers = #tpu.dot_dimension_numbers<[1], [0], [0], [1], [0, 0, 1, 1], [], []>} : vector<8x8xf32>, vector<8x128xf32>, vector<8x128xf32> -> vector<8x128xf32>
    %9 = arith.mulf %0, %0 : vector<8x8xf32>
    %cst_15 = arith.constant dense<0.000000e+00> : vector<8xf32>
    %10 = vector.multi_reduction <add>, %9, %cst_15 [1] : vector<8x8xf32> to vector<8xf32>
    %11 = vector.shape_cast %10 : vector<8xf32> to vector<8x1xf32>
    %12 = arith.mulf %2, %2 : vector<8x128xf32>
    %cst_16 = arith.constant dense<0.000000e+00> : vector<128xf32>
    %13 = vector.multi_reduction <add>, %12, %cst_16 [0] : vector<8x128xf32> to vector<128xf32>
    %14 = vector.shape_cast %13 : vector<128xf32> to vector<1x128xf32>
    %15 = vector.broadcast %11 : vector<8x1xf32> to vector<8x128xf32>
    %16 = vector.broadcast %14 : vector<1x128xf32> to vector<8x128xf32>
    %17 = arith.addf %15, %16 : vector<8x128xf32>
    %cst_17 = arith.constant 2.000000e+00 : f32
    %18 = vector.broadcast %cst_17 : f32 to vector<8x128xf32>
    %19 = arith.mulf %18, %8 : vector<8x128xf32>
    %20 = arith.subf %17, %19 : vector<8x128xf32>
    %cst_18 = arith.constant 0.000000e+00 : f32
    %21 = vector.broadcast %cst_18 : f32 to vector<8x128xf32>
    %22 = arith.maximumf %20, %21 : vector<8x128xf32>
    %23 = vector.broadcast %1 : vector<8x1xi32> to vector<8x128xi32>
    %24 = vector.broadcast %3 : vector<1x128xi32> to vector<8x128xi32>
    %25 = arith.cmpi eq, %23, %24 : vector<8x128xi32>
    %cst_19 = arith.constant 0x7F800000 : f32
    %26 = vector.broadcast %cst_19 : f32 to vector<8x128xf32>
    %27 = arith.select %25, %22, %26 : vector<8x128xi1>, vector<8x128xf32>
    %cst_20 = arith.constant 0.000000e+00 : f32
    %28 = vector.broadcast %cst_20 : f32 to vector<8x128xf32>
    %cst_21 = arith.constant 0.000000e+00 : f32
    %29 = vector.broadcast %cst_21 : f32 to vector<8x1xf32>
    %cst_22 = arith.constant dense<0x7F800000> : vector<8xf32>
    %30 = vector.multi_reduction <minimumf>, %27, %cst_22 [1] : vector<8x128xf32> to vector<8xf32>
    %31 = vector.shape_cast %30 : vector<8xf32> to vector<8x1xf32>
    %32 = vector.broadcast %31 : vector<8x1xf32> to vector<8x128xf32>
    %33 = arith.cmpf oeq, %27, %32 : vector<8x128xf32>
    %34 = arith.extui %33 : vector<8x128xi1> to vector<8x128xi32>
    %35 = arith.sitofp %34 : vector<8x128xi32> to vector<8x128xf32>
    %cst_23 = arith.constant dense<0.000000e+00> : vector<8xf32>
    %36 = vector.multi_reduction <add>, %35, %cst_23 [1] : vector<8x128xf32> to vector<8xf32>
    %37 = vector.shape_cast %36 : vector<8xf32> to vector<8x1xf32>
    %cst_24 = arith.constant 1.000000e-16 : f32
    %38 = vector.broadcast %cst_24 : f32 to vector<8x1xf32>
    %39 = arith.addf %31, %38 : vector<8x1xf32>
    %cst_25 = arith.constant 1.000000e+00 : f32
    %40 = vector.broadcast %cst_25 : f32 to vector<8x1xf32>
    %41 = arith.divf %40, %39 : vector<8x1xf32>
    %42 = arith.divf %41, %37 : vector<8x1xf32>
    %43 = vector.broadcast %42 : vector<8x1xf32> to vector<8x128xf32>
    %44 = arith.mulf %43, %35 : vector<8x128xf32>
    %45 = arith.addf %28, %44 : vector<8x128xf32>
    %46 = arith.addf %29, %41 : vector<8x1xf32>
    %cst_26 = arith.constant 0x7F800000 : f32
    %47 = vector.broadcast %cst_26 : f32 to vector<8x128xf32>
    %48 = arith.select %33, %47, %27 : vector<8x128xi1>, vector<8x128xf32>
    %cst_27 = arith.constant dense<0x7F800000> : vector<8xf32>
    %49 = vector.multi_reduction <minimumf>, %48, %cst_27 [1] : vector<8x128xf32> to vector<8xf32>
    %50 = vector.shape_cast %49 : vector<8xf32> to vector<8x1xf32>
    %51 = vector.broadcast %50 : vector<8x1xf32> to vector<8x128xf32>
    %52 = arith.cmpf oeq, %48, %51 : vector<8x128xf32>
    %53 = arith.extui %52 : vector<8x128xi1> to vector<8x128xi32>
    %54 = arith.sitofp %53 : vector<8x128xi32> to vector<8x128xf32>
    %cst_28 = arith.constant dense<0.000000e+00> : vector<8xf32>
    %55 = vector.multi_reduction <add>, %54, %cst_28 [1] : vector<8x128xf32> to vector<8xf32>
    %56 = vector.shape_cast %55 : vector<8xf32> to vector<8x1xf32>
    %cst_29 = arith.constant 1.000000e-16 : f32
    %57 = vector.broadcast %cst_29 : f32 to vector<8x1xf32>
    %58 = arith.addf %50, %57 : vector<8x1xf32>
    %cst_30 = arith.constant 1.000000e+00 : f32
    %59 = vector.broadcast %cst_30 : f32 to vector<8x1xf32>
    %60 = arith.divf %59, %58 : vector<8x1xf32>
    %61 = arith.divf %60, %56 : vector<8x1xf32>
    %62 = vector.broadcast %61 : vector<8x1xf32> to vector<8x128xf32>
    %63 = arith.mulf %62, %54 : vector<8x128xf32>
    %64 = arith.addf %45, %63 : vector<8x128xf32>
    %65 = arith.addf %46, %60 : vector<8x1xf32>
    %cst_31 = arith.constant 0x7F800000 : f32
    %66 = vector.broadcast %cst_31 : f32 to vector<8x128xf32>
    %67 = arith.select %52, %66, %48 : vector<8x128xi1>, vector<8x128xf32>
    %cst_32 = arith.constant dense<0x7F800000> : vector<8xf32>
    %68 = vector.multi_reduction <minimumf>, %67, %cst_32 [1] : vector<8x128xf32> to vector<8xf32>
    %69 = vector.shape_cast %68 : vector<8xf32> to vector<8x1xf32>
    %70 = vector.broadcast %69 : vector<8x1xf32> to vector<8x128xf32>
    %71 = arith.cmpf oeq, %67, %70 : vector<8x128xf32>
    %72 = arith.extui %71 : vector<8x128xi1> to vector<8x128xi32>
    %73 = arith.sitofp %72 : vector<8x128xi32> to vector<8x128xf32>
    %cst_33 = arith.constant dense<0.000000e+00> : vector<8xf32>
    %74 = vector.multi_reduction <add>, %73, %cst_33 [1] : vector<8x128xf32> to vector<8xf32>
    %75 = vector.shape_cast %74 : vector<8xf32> to vector<8x1xf32>
    %cst_34 = arith.constant 1.000000e-16 : f32
    %76 = vector.broadcast %cst_34 : f32 to vector<8x1xf32>
    %77 = arith.addf %69, %76 : vector<8x1xf32>
    %cst_35 = arith.constant 1.000000e+00 : f32
    %78 = vector.broadcast %cst_35 : f32 to vector<8x1xf32>
    %79 = arith.divf %78, %77 : vector<8x1xf32>
    %80 = arith.divf %79, %75 : vector<8x1xf32>
    %81 = vector.broadcast %80 : vector<8x1xf32> to vector<8x128xf32>
    %82 = arith.mulf %81, %73 : vector<8x128xf32>
    %83 = arith.addf %64, %82 : vector<8x128xf32>
    %84 = arith.addf %65, %79 : vector<8x1xf32>
    %cst_36 = arith.constant 0.000000e+00 : f32
    %85 = vector.broadcast %cst_36 : f32 to vector<8x1xf32>
    %86 = arith.cmpf ogt, %84, %85 : vector<8x1xf32>
    %cst_37 = arith.constant 1.000000e+00 : f32
    %87 = vector.broadcast %cst_37 : f32 to vector<8x1xf32>
    %88 = arith.divf %87, %84 : vector<8x1xf32>
    %cst_38 = arith.constant 0.000000e+00 : f32
    %89 = vector.broadcast %cst_38 : f32 to vector<8x1xf32>
    %90 = arith.select %86, %88, %89 : vector<8x1xi1>, vector<8x1xf32>
    %cst_39 = arith.constant dense<0.000000e+00> : vector<8x128xf32>
    %91 = tpu.matmul %83, %4, %cst_39 {dimension_numbers = #tpu.dot_dimension_numbers<[1], [0], [0], [1], [0, 0, 1, 1], [], []>} : vector<8x128xf32>, vector<128x128xf32>, vector<8x128xf32> -> vector<8x128xf32>
    %92 = vector.broadcast %90 : vector<8x1xf32> to vector<8x128xf32>
    %93 = arith.mulf %91, %92 : vector<8x128xf32>
    %cst_40 = arith.constant dense<0.000000e+00> : vector<8x128xf32>
    %94 = tpu.matmul %5, %6, %cst_40 {dimension_numbers = #tpu.dot_dimension_numbers<[1], [0], [0], [1], [0, 0, 1, 1], [], []>} : vector<8x4xf32>, vector<4x128xf32>, vector<8x128xf32> -> vector<8x128xf32>
    %95 = arith.addf %93, %94 : vector<8x128xf32>
    %96 = vector.broadcast %7 : vector<1x128xf32> to vector<8x128xf32>
    %97 = arith.addf %95, %96 : vector<8x128xf32>
    %cst_41 = arith.constant 0.000000e+00 : f32
    %98 = vector.broadcast %cst_41 : f32 to vector<8x128xf32>
    %99 = arith.maximumf %97, %98 : vector<8x128xf32>
    %c0_42 = arith.constant 0 : index
    %c0_43 = arith.constant 0 : index
    %100 = vector.load %arg10[%c0_42, %c0_43] : memref<8x128xf32, #tpu.memory_space<vmem>>, vector<8x128xf32>
    tpu.vector_store %arg10[%c0_42, %c0_43], %99 {strides = array<i32>} : memref<8x128xf32, #tpu.memory_space<vmem>>, vector<8x128xf32>,
    %c0_i32 = arith.constant 0 : i32
    %101 = vector.broadcast %c0_i32 : i32 to vector<8x1xi32>
    %102 = arith.cmpi sge, %1, %101 : vector<8x1xi32>
    %103 = arith.extui %102 : vector<8x1xi1> to vector<8x1xi32>
    %104 = arith.sitofp %103 : vector<8x1xi32> to vector<8x1xf32>
    %105 = vector.broadcast %104 : vector<8x1xf32> to vector<8x128xf32>
    %106 = arith.mulf %99, %105 : vector<8x128xf32>
    %cst_44 = arith.constant dense<0.000000e+00> : vector<128xf32>
    %107 = vector.multi_reduction <add>, %106, %cst_44 [0] : vector<8x128xf32> to vector<128xf32>
    %108 = vector.shape_cast %107 : vector<128xf32> to vector<1x128xf32>
    %c0_45 = arith.constant 0 : index
    %c0_46 = arith.constant 0 : index
    %c0_47 = arith.constant 0 : index
    %109 = vector.load %arg11[%c0_45, %c0_46, %c0_47] : memref<1x8x128xf32, #tpu.memory_space<vmem>>, vector<1x1x128xf32>
    %110 = vector.shape_cast %109 : vector<1x1x128xf32> to vector<1x128xf32>
    %111 = vector.shape_cast %108 : vector<1x128xf32> to vector<1x1x128xf32>
    tpu.vector_store %arg11[%c0_45, %c0_46, %c0_47], %111 {strides = array<i32>} : memref<1x8x128xf32, #tpu.memory_space<vmem>>, vector<1x1x128xf32>,
    %112 = arith.mulf %106, %106 : vector<8x128xf32>
    %cst_48 = arith.constant dense<0.000000e+00> : vector<128xf32>
    %113 = vector.multi_reduction <add>, %112, %cst_48 [0] : vector<8x128xf32> to vector<128xf32>
    %114 = vector.shape_cast %113 : vector<128xf32> to vector<1x128xf32>
    %c0_49 = arith.constant 0 : index
    %c1 = arith.constant 1 : index
    %c0_50 = arith.constant 0 : index
    %115 = vector.load %arg11[%c0_49, %c1, %c0_50] : memref<1x8x128xf32, #tpu.memory_space<vmem>>, vector<1x1x128xf32>
    %116 = vector.shape_cast %115 : vector<1x1x128xf32> to vector<1x128xf32>
    %117 = vector.shape_cast %114 : vector<1x128xf32> to vector<1x1x128xf32>
    tpu.vector_store %arg11[%c0_49, %c1, %c0_50], %117 {strides = array<i32>} : memref<1x8x128xf32, #tpu.memory_space<vmem>>, vector<1x1x128xf32>,
    return
  }
  func.func @transform_0(%arg0: i32, %arg1: memref<2xi32, #tpu.memory_space<smem>>) -> (i32, i32) {
    %c0_i32 = arith.constant 0 : i32
    %c0_i32_0 = arith.constant 0 : i32
    return %arg0, %c0_i32 : i32, i32
  }
  func.func @transform_1(%arg0: i32, %arg1: memref<2xi32, #tpu.memory_space<smem>>) -> (i32, i32) {
    %c0_i32 = arith.constant 0 : i32
    %c0_i32_0 = arith.constant 0 : i32
    return %arg0, %c0_i32 : i32, i32
  }
  func.func @transform_2(%arg0: i32, %arg1: memref<2xi32, #tpu.memory_space<smem>>) -> (i32, i32) {
    %0 = arith.index_cast %arg0 : i32 to index
    %1 = memref.load %arg1[%0] : memref<2xi32, #tpu.memory_space<smem>>
    %c0_i32 = arith.constant 0 : i32
    %c0_i32_0 = arith.constant 0 : i32
    return %c0_i32, %1 : i32, i32
  }
  func.func @transform_3(%arg0: i32, %arg1: memref<2xi32, #tpu.memory_space<smem>>) -> (i32, i32) {
    %0 = arith.index_cast %arg0 : i32 to index
    %1 = memref.load %arg1[%0] : memref<2xi32, #tpu.memory_space<smem>>
    %c0_i32 = arith.constant 0 : i32
    %c0_i32_0 = arith.constant 0 : i32
    return %c0_i32, %1 : i32, i32
  }
  func.func @transform_4(%arg0: i32, %arg1: memref<2xi32, #tpu.memory_space<smem>>) -> (i32, i32) {
    %0 = arith.index_cast %arg0 : i32 to index
    %1 = memref.load %arg1[%0] : memref<2xi32, #tpu.memory_space<smem>>
    %c0_i32 = arith.constant 0 : i32
    %c0_i32_0 = arith.constant 0 : i32
    return %1, %c0_i32 : i32, i32
  }
  func.func @transform_5(%arg0: i32, %arg1: memref<2xi32, #tpu.memory_space<smem>>) -> (i32, i32) {
    %c0_i32 = arith.constant 0 : i32
    %c0_i32_0 = arith.constant 0 : i32
    return %arg0, %c0_i32 : i32, i32
  }
  func.func @transform_6(%arg0: i32, %arg1: memref<2xi32, #tpu.memory_space<smem>>) -> (i32, i32) {
    %c0_i32 = arith.constant 0 : i32
    %c0_i32_0 = arith.constant 0 : i32
    %c0_i32_1 = arith.constant 0 : i32
    return %c0_i32, %c0_i32_0 : i32, i32
  }
  func.func @transform_7(%arg0: i32, %arg1: memref<2xi32, #tpu.memory_space<smem>>) -> (i32, i32) {
    %c0_i32 = arith.constant 0 : i32
    %c0_i32_0 = arith.constant 0 : i32
    %c0_i32_1 = arith.constant 0 : i32
    return %c0_i32, %c0_i32_0 : i32, i32
  }
  func.func @transform_8(%arg0: i32, %arg1: memref<2xi32, #tpu.memory_space<smem>>) -> (i32, i32) {
    %c0_i32 = arith.constant 0 : i32
    %c0_i32_0 = arith.constant 0 : i32
    return %arg0, %c0_i32 : i32, i32
  }
  func.func @transform_9(%arg0: i32, %arg1: memref<2xi32, #tpu.memory_space<smem>>) -> (i32, i32, i32) {
    %c0_i32 = arith.constant 0 : i32
    %c0_i32_0 = arith.constant 0 : i32
    %c0_i32_1 = arith.constant 0 : i32
    return %arg0, %c0_i32, %c0_i32_0 : i32, i32, i32
  }
}

</mosaic_0001>

<llo_original>
// kernel: tpu_custom_call.1
$region0: #{tpu_custom_call.1}
  #allocation0 [shape = 'u32[]', space=smem, size = 0x4, offset = 0x4, fixed_abs, tag = 'smem constant byte address 0x4 - core index']
  #allocation1 [shape = 'u32[144,128]{1,0:T(1,128)}', space=vmem, size = 0x12000, scoped, tag = 'internal scratch']
  #allocation2 [shape = 's32[1]{0}', space=sflag, size = 0x4, scoped, tag = 'scoped memory for tpu_custom_call.1']
  #allocation3 [shape = 'u8[512]{0}', space=smem, size = 0x200, scoped, tag = 'prefetched SMEM operand 0']
  %s0 = inlined_call_operand.vmem [shape: s32[2], index: 0, kind: input, shape index: {}]
  %s1 = inlined_call_operand.vmem [shape: f32[16,8], index: 1, kind: input, shape index: {}]
  %s2 = inlined_call_operand.vmem [shape: s32[16,1], index: 2, kind: input, shape index: {}]
  %s3 = inlined_call_operand.vmem [shape: f32[8,256], index: 3, kind: input, shape index: {}]
  %s4 = inlined_call_operand.vmem [shape: s32[1,256], index: 4, kind: input, shape index: {}]
  %s5 = inlined_call_operand.hbm [shape: f32[256,128], index: 5, kind: input, shape index: {}]
  %s6 = inlined_call_operand.vmem [shape: f32[16,4], index: 6, kind: input, shape index: {}]
  %s7 = inlined_call_operand.vmem [shape: f32[4,128], index: 7, kind: input, shape index: {}]
  %s8 = inlined_call_operand.vmem [shape: f32[1,128], index: 8, kind: input, shape index: {}]
  %s9 = inlined_call_operand.hbm [shape: f32[16,128], index: 9, kind: output, shape index: {0}]
  %s10 = inlined_call_operand.hbm [shape: f32[2,8,128], index: 10, kind: output, shape index: {1}]
  %11 = xla_tuple %s9, %s10
  %s12 = sld [smem:[#allocation0]]
  $region77: #{tpu_custom_call.1} parent=0
    _
  %s14 = ssub.s32 1, %s12
  %s15 = scalar_select 0, %s14, %s12
  %s16 = sshll.u32 %s0, 4
  %s17 = int_to_ptr.vmem [resolvable:$true] %s16
  %19 = dma.vmem_to_smem %s17, 16, [#allocation3], [#allocation2]
  %20 = dma.done [#allocation2], 16
  %21 = sfence
  $region1: #{tpu_custom_call.1} parent=0
    #allocation4 [shape = 'u8[131072]{0}', space=vmem, size = 0x20000, scoped, tag = 'input window, operand 5']
    #allocation5 [shape = 's32[2]{0}', space=sflag, size = 0x8, scoped, tag = 'scoped memory for tpu_custom_call.1']
    #allocation6 [shape = 's32[2]{0}', space=sflag, size = 0x8, scoped, tag = 'scoped memory for tpu_custom_call.1']
    #allocation7 [shape = 'u8[8192]{0}', space=vmem, size = 0x2000, scoped, tag = 'output window, operand 0']
    #allocation8 [shape = 'u8[8192]{0}', space=vmem, size = 0x2000, scoped, tag = 'output window, operand 1']
    #allocation9 [shape = 's32[2]{0}', space=sflag, size = 0x8, scoped, tag = 'scoped memory for tpu_custom_call.1']
    %22 = vsyncpa [#allocation5], 0
    %s23 = scalar_lea.sflag [#allocation5], 1
    %24 = vsyncpa %s23, 0
    %25 = vsyncpa [#allocation6], 0
    %s26 = scalar_lea.sflag [#allocation6], 1
    %27 = vsyncpa %s26, 0
    %28 = vsyncpa [#allocation9], 0
    %s29 = scalar_lea.sflag [#allocation9], 1
    %30 = vsyncpa %s29, 0
    loop: start=0, step=1, limit=4
    $region2: #{tpu_custom_call.1} parent=1 // loop_pre_header
      _
    $region3: #{tpu_custom_call.1} parent=1 // loop_header
      %s32 = sphi 0, %s36
      %p33 = scmp.ge.s32.totalorder %s32, 4
      %s42 = sphi 0, %s44
      %s45 = sphi 0, %s42
      %s46 = sphi 0, %s45
      %s62 = sphi 0, %s46
      %s68 = sphi 0, %s70
      %s71 = sphi 0, %s68
      %s72 = sphi 0, %s71
      %s88 = sphi 0, %s72
      %s96 = sphi 0, %s98
      %s99 = sphi 0, %s96
      %s100 = sphi 0, %s99
      %s116 = sphi 0, %s100
      %s124 = sphi 0, %s126
      %s127 = sphi 0, %s124
      %s128 = sphi 0, %s127
      %s144 = sphi 0, %s128
      %s152 = sphi 0, %s154
      %s155 = sphi 0, %s152
      %s156 = sphi 0, %s155
      %s172 = sphi 0, %s156
      %s178 = sphi 0, %s180
      %s181 = sphi 0, %s178
      %s182 = sphi 0, %s181
      %s198 = sphi 0, %s182
      %s202 = sphi 0, %s202
      %s204 = sphi 0, %s202
      %s205 = sphi 0, %s204
      %s219 = sphi 0, %s205
      %s223 = sphi 0, %s223
      %s225 = sphi 0, %s223
      %s226 = sphi 0, %s225
      %s240 = sphi 0, %s226
      %s246 = sphi 0, %s248
      %s249 = sphi 0, %s246
      %s250 = sphi 0, %s249
      %s266 = sphi 0, %s250
      %s272 = sphi 0, %s274
      %s275 = sphi 0, %s272
      %s276 = sphi 0, %s275
      %s292 = sphi 0, %s276
    $region4: #{tpu_custom_call.1} parent=1 // loop_header_branch
      %35 = sbr.rel (%p33) target = $region8
    $region5: #{tpu_custom_call.1} parent=1 // loop_body
      %s37 = ssub.s32 %s32, 1
      %s38 = ssub.s32 %s32, 2
      %s39 = sadd.s32 %s32, 1
      %s40 = ssub.s32 %s32, %s39
      %p41 = scmp.eq.s32.totalorder %s40, 0
      %s43 = sadd.s32 %s42, 1
      %s44 = scalar_select %p41, %s42, %s43
      %p47 = pneg %p41
      %p48 = scmp.eq.s32.totalorder %s32, 1
      %p49 = por %p47, %p48
      %p50 = scmp.ne.s32.totalorder %s42, %s45
      %p51 = scmp.eq.s32.totalorder %s32, 0
      %p52 = por %p50, %p51
      %p53 = scmp.ne.s32.totalorder %s42, %s45
      %p54 = scmp.eq.s32.totalorder %s37, 1
      %p55 = por %p53, %p54
      %p56 = scmp.ne.s32.totalorder %s45, %s46
      %p57 = scmp.eq.s32.totalorder %s37, 0
      %p58 = por %p56, %p57
      %p59 = scmp.ne.s32.totalorder %s45, %s46
      %p60 = scmp.eq.s32.totalorder %s38, 1
      %p61 = por %p59, %p60
      %p63 = scmp.ne.s32.totalorder %s46, %s62
      %p64 = scmp.eq.s32.totalorder %s38, 0
      %p65 = por %p63, %p64
      %s66 = ssub.s32 %s32, %s39
      %p67 = scmp.eq.s32.totalorder %s66, 0
      %s69 = sadd.s32 %s68, 1
      %s70 = scalar_select %p67, %s68, %s69
      %p73 = pneg %p67
      %p74 = scmp.eq.s32.totalorder %s32, 1
      %p75 = por %p73, %p74
      %p76 = scmp.ne.s32.totalorder %s68, %s71
      %p77 = scmp.eq.s32.totalorder %s32, 0
      %p78 = por %p76, %p77
      %p79 = scmp.ne.s32.totalorder %s68, %s71
      %p80 = scmp.eq.s32.totalorder %s37, 1
      %p81 = por %p79, %p80
      %p82 = scmp.ne.s32.totalorder %s71, %s72
      %p83 = scmp.eq.s32.totalorder %s37, 0
      %p84 = por %p82, %p83
      %p85 = scmp.ne.s32.totalorder %s71, %s72
      %p86 = scmp.eq.s32.totalorder %s38, 1
      %p87 = por %p85, %p86
      %p89 = scmp.ne.s32.totalorder %s72, %s88
      %p90 = scmp.eq.s32.totalorder %s38, 0
      %p91 = por %p89, %p90
      %s92 = sld [smem:[#allocation3 + %s32]]
      %s93 = sld [smem:[#allocation3 + %s39]]
      %s94 = ssub.s32 %s92, %s93
      %p95 = scmp.eq.s32.totalorder %s94, 0
      %s97 = sadd.s32 %s96, 1
      %s98 = scalar_select %p95, %s96, %s97
      %p101 = pneg %p95
      %p102 = scmp.eq.s32.totalorder %s32, 1
      %p103 = por %p101, %p102
      %p104 = scmp.ne.s32.totalorder %s96, %s99
      %p105 = scmp.eq.s32.totalorder %s32, 0
      %p106 = por %p104, %p105
      %p107 = scmp.ne.s32.totalorder %s96, %s99
      %p108 = scmp.eq.s32.totalorder %s37, 1
      %p109 = por %p107, %p108
      %p110 = scmp.ne.s32.totalorder %s99, %s100
      %p111 = scmp.eq.s32.totalorder %s37, 0
      %p112 = por %p110, %p111
      %p113 = scmp.ne.s32.totalorder %s99, %s100
      %p114 = scmp.eq.s32.totalorder %s38, 1
      %p115 = por %p113, %p114
      %p117 = scmp.ne.s32.totalorder %s100, %s116
      %p118 = scmp.eq.s32.totalorder %s38, 0
      %p119 = por %p117, %p118
      %s120 = sld [smem:[#allocation3 + %s32]]
      %s121 = sld [smem:[#allocation3 + %s39]]
      %s122 = ssub.s32 %s120, %s121
      %p123 = scmp.eq.s32.totalorder %s122, 0
      %s125 = sadd.s32 %s124, 1
      %s126 = scalar_select %p123, %s124, %s125
      %p129 = pneg %p123
      %p130 = scmp.eq.s32.totalorder %s32, 1
      %p131 = por %p129, %p130
      %p132 = scmp.ne.s32.totalorder %s124, %s127
      %p133 = scmp.eq.s32.totalorder %s32, 0
      %p134 = por %p132, %p133
      %p135 = scmp.ne.s32.totalorder %s124, %s127
      %p136 = scmp.eq.s32.totalorder %s37, 1
      %p137 = por %p135, %p136
      %p138 = scmp.ne.s32.totalorder %s127, %s128
      %p139 = scmp.eq.s32.totalorder %s37, 0
      %p140 = por %p138, %p139
      %p141 = scmp.ne.s32.totalorder %s127, %s128
      %p142 = scmp.eq.s32.totalorder %s38, 1
      %p143 = por %p141, %p142
      %p145 = scmp.ne.s32.totalorder %s128, %s144
      %p146 = scmp.eq.s32.totalorder %s38, 0
      %p147 = por %p145, %p146
      %s148 = sld [smem:[#allocation3 + %s32]]
      %s149 = sld [smem:[#allocation3 + %s39]]
      %s150 = ssub.s32 %s148, %s149
      %p151 = scmp.eq.s32.totalorder %s150, 0
      %s153 = sadd.s32 %s152, 1
      %s154 = scalar_select %p151, %s152, %s153
      %p157 = pneg %p151
      %p158 = scmp.eq.s32.totalorder %s32, 1
      %p159 = por %p157, %p158
      %p160 = scmp.ne.s32.totalorder %s152, %s155
      %p161 = scmp.eq.s32.totalorder %s32, 0
      %p162 = por %p160, %p161
      %p163 = scmp.ne.s32.totalorder %s152, %s155
      %p164 = scmp.eq.s32.totalorder %s37, 1
      %p165 = por %p163, %p164
      %p166 = scmp.ne.s32.totalorder %s155, %s156
      %p167 = scmp.eq.s32.totalorder %s37, 0
      %p168 = por %p166, %p167
      %p169 = scmp.ne.s32.totalorder %s155, %s156
      %p170 = scmp.eq.s32.totalorder %s38, 1
      %p171 = por %p169, %p170
      %p173 = scmp.ne.s32.totalorder %s156, %s172
      %p174 = scmp.eq.s32.totalorder %s38, 0
      %p175 = por %p173, %p174
      %s176 = ssub.s32 %s32, %s39
      %p177 = scmp.eq.s32.totalorder %s176, 0
      %s179 = sadd.s32 %s178, 1
      %s180 = scalar_select %p177, %s178, %s179
      %p183 = pneg %p177
      %p184 = scmp.eq.s32.totalorder %s32, 1
      %p185 = por %p183, %p184
      %p186 = scmp.ne.s32.totalorder %s178, %s181
      %p187 = scmp.eq.s32.totalorder %s32, 0
      %p188 = por %p186, %p187
      %p189 = scmp.ne.s32.totalorder %s178, %s181
      %p190 = scmp.eq.s32.totalorder %s37, 1
      %p191 = por %p189, %p190
      %p192 = scmp.ne.s32.totalorder %s181, %s182
      %p193 = scmp.eq.s32.totalorder %s37, 0
      %p194 = por %p192, %p193
      %p195 = scmp.ne.s32.totalorder %s181, %s182
      %p196 = scmp.eq.s32.totalorder %s38, 1
      %p197 = por %p195, %p196
      %p199 = scmp.ne.s32.totalorder %s182, %s198
      %p200 = scmp.eq.s32.totalorder %s38, 0
      %p201 = por %p199, %p200
      %s203 = sadd.s32 %s202, 1
      %p206 = scmp.eq.s32.totalorder %s32, 1
      %p207 = scmp.ne.s32.totalorder %s202, %s204
      %p208 = scmp.eq.s32.totalorder %s32, 0
      %p209 = por %p207, %p208
      %p210 = scmp.ne.s32.totalorder %s202, %s204
      %p211 = scmp.eq.s32.totalorder %s37, 1
      %p212 = por %p210, %p211
      %p213 = scmp.ne.s32.totalorder %s204, %s205
      %p214 = scmp.eq.s32.totalorder %s37, 0
      %p215 = por %p213, %p214
      %p216 = scmp.ne.s32.totalorder %s204, %s205
      %p217 = scmp.eq.s32.totalorder %s38, 1
      %p218 = por %p216, %p217
      %p220 = scmp.ne.s32.totalorder %s205, %s219
      %p221 = scmp.eq.s32.totalorder %s38, 0
      %p222 = por %p220, %p221
      %s224 = sadd.s32 %s223, 1
      %p227 = scmp.eq.s32.totalorder %s32, 1
      %p228 = scmp.ne.s32.totalorder %s223, %s225
      %p229 = scmp.eq.s32.totalorder %s32, 0
      %p230 = por %p228, %p229
      %p231 = scmp.ne.s32.totalorder %s223, %s225
      %p232 = scmp.eq.s32.totalorder %s37, 1
      %p233 = por %p231, %p232
      %p234 = scmp.ne.s32.totalorder %s225, %s226
      %p235 = scmp.eq.s32.totalorder %s37, 0
      %p236 = por %p234, %p235
      %p237 = scmp.ne.s32.totalorder %s225, %s226
      %p238 = scmp.eq.s32.totalorder %s38, 1
      %p239 = por %p237, %p238
      %p241 = scmp.ne.s32.totalorder %s226, %s240
      %p242 = scmp.eq.s32.totalorder %s38, 0
      %p243 = por %p241, %p242
      %s244 = ssub.s32 %s32, %s39
      %p245 = scmp.eq.s32.totalorder %s244, 0
      %s247 = sadd.s32 %s246, 1
      %s248 = scalar_select %p245, %s246, %s247
      %p251 = pneg %p245
      %p252 = scmp.eq.s32.totalorder %s32, 1
      %p253 = por %p251, %p252
      %p254 = scmp.ne.s32.totalorder %s246, %s249
      %p255 = scmp.eq.s32.totalorder %s32, 0
      %p256 = por %p254, %p255
      %p257 = scmp.ne.s32.totalorder %s246, %s249
      %p258 = scmp.eq.s32.totalorder %s37, 1
      %p259 = por %p257, %p258
      %p260 = scmp.ne.s32.totalorder %s249, %s250
      %p261 = scmp.eq.s32.totalorder %s37, 0
      %p262 = por %p260, %p261
      %p263 = scmp.ne.s32.totalorder %s249, %s250
      %p264 = scmp.eq.s32.totalorder %s38, 1
      %p265 = por %p263, %p264
      %p267 = scmp.ne.s32.totalorder %s250, %s266
      %p268 = scmp.eq.s32.totalorder %s38, 0
      %p269 = por %p267, %p268
      %s270 = ssub.s32 %s32, %s39
      %p271 = scmp.eq.s32.totalorder %s270, 0
      %s273 = sadd.s32 %s272, 1
      %s274 = scalar_select %p271, %s272, %s273
      %p277 = pneg %p271
      %p278 = scmp.eq.s32.totalorder %s32, 1
      %p279 = por %p277, %p278
      %p280 = scmp.ne.s32.totalorder %s272, %s275
      %p281 = scmp.eq.s32.totalorder %s32, 0
      %p282 = por %p280, %p281
      %p283 = scmp.ne.s32.totalorder %s272, %s275
      %p284 = scmp.eq.s32.totalorder %s37, 1
      %p285 = por %p283, %p284
      %p286 = scmp.ne.s32.totalorder %s275, %s276
      %p287 = scmp.eq.s32.totalorder %s37, 0
      %p288 = por %p286, %p287
      %p289 = scmp.ne.s32.totalorder %s275, %s276
      %p290 = scmp.eq.s32.totalorder %s38, 1
      %p291 = por %p289, %p290
      %p293 = scmp.ne.s32.totalorder %s276, %s292
      %p294 = scmp.eq.s32.totalorder %s38, 0
      %p295 = por %p293, %p294
      %p296 = scmp.le.s32.totalorder 1, %s32
      %p297 = scmp.lt.s32.totalorder %s32, 3
      %p298 = pnand %p296, %p297
      %p299 = pneg %p298
      // Predicated region
      $region9: #{tpu_custom_call.1} parent=5 // pred_check
        _
      $region10: #{tpu_custom_call.1} parent=5 // pred_check_branch
        %301 = sbr.rel (%p298) target = $region12
      $region11: #{tpu_custom_call.1} parent=5 // pred_region
        %s302 = ssub.s32 %s32, 1
        // Predicated region
        $region13: #{tpu_custom_call.1} parent=11 // pred_check
          %p303 = pneg %p215
        $region14: #{tpu_custom_call.1} parent=11 // pred_check_branch
          %305 = sbr.rel (%p303) target = $region16
        $region15: #{tpu_custom_call.1} parent=11 // pred_region
          _
        $region16: #{tpu_custom_call.1} parent=11 // pred_fallthru
          _
        // Predicated region
        $region17: #{tpu_custom_call.1} parent=11 // pred_check
          %p306 = pneg %p236
        $region18: #{tpu_custom_call.1} parent=11 // pred_check_branch
          %308 = sbr.rel (%p306) target = $region20
        $region19: #{tpu_custom_call.1} parent=11 // pred_region
          _
        $region20: #{tpu_custom_call.1} parent=11 // pred_fallthru
          _
      $region12: #{tpu_custom_call.1} parent=5 // pred_fallthru
        _
      %p309 = scmp.lt.s32.totalorder %s32, 2
      // Predicated region
      $region21: #{tpu_custom_call.1} parent=5 // pred_check
        %p310 = pneg %p309
      $region22: #{tpu_custom_call.1} parent=5 // pred_check_branch
        %312 = sbr.rel (%p310) target = $region24
      $region23: #{tpu_custom_call.1} parent=5 // pred_region
        // Predicated region
        $region25: #{tpu_custom_call.1} parent=23 // pred_check
          %p313 = pneg %p52
        $region26: #{tpu_custom_call.1} parent=23 // pred_check_branch
          %315 = sbr.rel (%p313) target = $region28
        $region27: #{tpu_custom_call.1} parent=23 // pred_region
          %p316 = scmp.lt.s32.totalorder %s32, 1
          %s317 = scalar_select %p316, %s32, 1
          %s318 = smul.addr %s317, 8
          %s319 = scalar_lea.vmem %s1, %s318
        $region28: #{tpu_custom_call.1} parent=23 // pred_fallthru
          _
        // Predicated region
        $region29: #{tpu_custom_call.1} parent=23 // pred_check
          %p320 = pneg %p78
        $region30: #{tpu_custom_call.1} parent=23 // pred_check_branch
          %322 = sbr.rel (%p320) target = $region32
        $region31: #{tpu_custom_call.1} parent=23 // pred_region
          %p323 = scmp.lt.s32.totalorder %s32, 1
          %s324 = scalar_select %p323, %s32, 1
          %s325 = smul.addr %s324, 8
          %s326 = scalar_lea.vmem %s2, %s325
        $region32: #{tpu_custom_call.1} parent=23 // pred_fallthru
          _
        // Predicated region
        $region33: #{tpu_custom_call.1} parent=23 // pred_check
          %p327 = pneg %p106
        $region34: #{tpu_custom_call.1} parent=23 // pred_check_branch
          %329 = sbr.rel (%p327) target = $region36
        $region35: #{tpu_custom_call.1} parent=23 // pred_region
          %s330 = sld [smem:[#allocation3 + %s32]]
          %p331 = scmp.lt.s32.totalorder %s330, 1
          %s332 = scalar_select %p331, %s330, 1
          %s333 = smul.addr %s332, 8
          %s334 = scalar_lea.vmem %s3, %s333
          %s335 = sld [smem:[#allocation3 + %s32]]
        $region36: #{tpu_custom_call.1} parent=23 // pred_fallthru
          _
        // Predicated region
        $region37: #{tpu_custom_call.1} parent=23 // pred_check
          %p336 = pneg %p134
        $region38: #{tpu_custom_call.1} parent=23 // pred_check_branch
          %338 = sbr.rel (%p336) target = $region40
        $region39: #{tpu_custom_call.1} parent=23 // pred_region
          %s339 = sld [smem:[#allocation3 + %s32]]
          %p340 = scmp.lt.s32.totalorder %s339, 1
          %s341 = scalar_select %p340, %s339, 1
          %s342 = scalar_lea.vmem %s4, %s341
          %s343 = sld [smem:[#allocation3 + %s32]]
        $region40: #{tpu_custom_call.1} parent=23 // pred_fallthru
          _
        // Predicated region
        $region41: #{tpu_custom_call.1} parent=23 // pred_check
          %p344 = pneg %p162
        $region42: #{tpu_custom_call.1} parent=23 // pred_check_branch
          %346 = sbr.rel (%p344) target = $region44
        $region43: #{tpu_custom_call.1} parent=23 // pred_region
          %s347 = sand.u32 %s152, 1
          %s348 = scalar_lea.sflag [#allocation5], %s347
          %s349 = sand.u32 %s152, 1
          %s350 = smul.addr %s349, 128
          %s351 = scalar_lea.vmem [#allocation4], %s350
          %s352 = sld [smem:[#allocation3 + %s32]]
          %s353 = smul.u32 16, %s352
          %s355 = ssub.s32 2048, 2048
          %356 = vsyncadd %s348, %s355
          %s357 = smul.addr %s353, 128
          %s358 = scalar_lea.hbm %s5, %s357
          %s359 = sshll.u32 %s351, 4
          %s360 = int_to_ptr.vmem [resolvable:$true] %s359
          %365 = dma.hbm_to_vmem [thread:$0]  %s358, 2048, %s360, %s348, 128, 128, 8
        $region44: #{tpu_custom_call.1} parent=23 // pred_fallthru
          _
        // Predicated region
        $region45: #{tpu_custom_call.1} parent=23 // pred_check
          %p366 = pneg %p188
        $region46: #{tpu_custom_call.1} parent=23 // pred_check_branch
          %368 = sbr.rel (%p366) target = $region48
        $region47: #{tpu_custom_call.1} parent=23 // pred_region
          %p369 = scmp.lt.s32.totalorder %s32, 1
          %s370 = scalar_select %p369, %s32, 1
          %s371 = smul.addr %s370, 8
          %s372 = scalar_lea.vmem %s6, %s371
        $region48: #{tpu_custom_call.1} parent=23 // pred_fallthru
          _
      $region24: #{tpu_custom_call.1} parent=5 // pred_fallthru
        _
      %p373 = scmp.le.s32.totalorder 1, %s32
      %p374 = scmp.lt.s32.totalorder %s32, 3
      %p375 = pnand %p373, %p374
      %p376 = pneg %p375
      // Predicated region
      $region49: #{tpu_custom_call.1} parent=5 // pred_check
        _
      $region50: #{tpu_custom_call.1} parent=5 // pred_check_branch
        %378 = sbr.rel (%p375) target = $region52
      $region51: #{tpu_custom_call.1} parent=5 // pred_region
        %s379 = ssub.s32 %s32, 1
        %s380 = sand.u32 %s155, 1
        %s381 = scalar_lea.sflag [#allocation5], %s380
        %s382 = sand.u32 %s155, 1
        %s383 = smul.addr %s382, 128
        %s384 = scalar_lea.vmem [#allocation4], %s383
        // Predicated region
        $region53: #{tpu_custom_call.1} parent=51 // pred_check
          %p385 = pneg %p168
        $region54: #{tpu_custom_call.1} parent=51 // pred_check_branch
          %387 = sbr.rel (%p385) target = $region56
        $region55: #{tpu_custom_call.1} parent=51 // pred_region
          %388 = dma.done %s381, 2048
        $region56: #{tpu_custom_call.1} parent=51 // pred_fallthru
          _
        %p389 = scmp.lt.s32.totalorder %s37, 1
        %s390 = scalar_select %p389, %s37, 1
        %s391 = smul.addr %s390, 8
        %s392 = scalar_lea.vmem %s1, %s391
        %p393 = pneg %p58
        %p394 = pneg %p55
        %p395 = scmp.lt.s32.totalorder %s37, 1
        %s396 = scalar_select %p395, %s37, 1
        %s397 = smul.addr %s396, 8
        %s398 = scalar_lea.vmem %s2, %s397
        %p399 = pneg %p84
        %p400 = pneg %p81
        %s401 = sld [smem:[#allocation3 + %s37]]
        %p402 = scmp.lt.s32.totalorder %s401, 1
        %s403 = scalar_select %p402, %s401, 1
        %s404 = smul.addr %s403, 8
        %s405 = scalar_lea.vmem %s3, %s404
        %p406 = pneg %p112
        %p407 = pneg %p109
        %s408 = sld [smem:[#allocation3 + %s37]]
        %p409 = scmp.lt.s32.totalorder %s408, 1
        %s410 = scalar_select %p409, %s408, 1
        %s411 = scalar_lea.vmem %s4, %s410
        %p412 = pneg %p140
        %p413 = pneg %p137
        %s414 = sand.u32 %s155, 1
        %s415 = scalar_lea.sflag [#allocation5], %s414
        %s416 = sand.u32 %s155, 1
        %s417 = smul.addr %s416, 128
        %s418 = scalar_lea.vmem [#allocation4], %s417
        %p419 = pneg %p168
        %p420 = pneg %p165
        %p421 = scmp.lt.s32.totalorder %s37, 1
        %s422 = scalar_select %p421, %s37, 1
        %s423 = smul.addr %s422, 8
        %s424 = scalar_lea.vmem %s6, %s423
        %p425 = pneg %p194
        %p426 = pneg %p191
        %p427 = pneg %p215
        %p428 = pneg %p212
        %p429 = pneg %p236
        %p430 = pneg %p233
        %p431 = pneg %p262
        %p432 = pneg %p259
        %s433 = sand.u32 %s249, 1
        %s434 = scalar_lea.sflag [#allocation6], %s433
        %s435 = sand.u32 %s249, 1
        %s436 = smul.addr %s435, 8
        %s437 = scalar_lea.vmem [#allocation7], %s436
        %p438 = pneg %p288
        %p439 = pneg %p285
        %s440 = sand.u32 %s275, 1
        %s441 = scalar_lea.sflag [#allocation9], %s440
        %s442 = sand.u32 %s275, 1
        %s443 = smul.addr %s442, 8
        %s444 = scalar_lea.vmem [#allocation8], %s443
        %p445 = scmp.lt.s32.totalorder %s37, 1
        %s446 = scalar_select %p445, %s37, 1
        %s447 = smul.addr %s446, 8
        %s448 = scalar_lea.vmem %s1, %s447
        %p449 = scmp.lt.s32.totalorder %s37, 1
        %s450 = scalar_select %p449, %s37, 1
        %s451 = smul.addr %s450, 8
        %s452 = scalar_lea.vmem %s2, %s451
        %s453 = sld [smem:[#allocation3 + %s37]]
        %p454 = scmp.lt.s32.totalorder %s453, 1
        %s455 = scalar_select %p454, %s453, 1
        %s456 = smul.addr %s455, 8
        %s457 = scalar_lea.vmem %s3, %s456
        %s458 = sld [smem:[#allocation3 + %s37]]
        %s459 = sld [smem:[#allocation3 + %s37]]
        %p460 = scmp.lt.s32.totalorder %s459, 1
        %s461 = scalar_select %p460, %s459, 1
        %s462 = scalar_lea.vmem %s4, %s461
        %s463 = sld [smem:[#allocation3 + %s37]]
        %s464 = sld [smem:[#allocation3 + %s37]]
        %s465 = smul.u32 16, %s464
        %p466 = scmp.lt.s32.totalorder %s37, 1
        %s467 = scalar_select %p466, %s37, 1
        %s468 = smul.addr %s467, 8
        %s469 = scalar_lea.vmem %s6, %s468
        %v470 = vld [vmem:[%s448] sm:$0xff]
        %v471 = vld [vmem:[%s452] sm:$0xff]
        %v472 = vld [vmem:[%s457] sm:$0xff]
        %v473 = vld [vmem:[%s462] sm:$0x1]
        %v474 = vld [vmem:[%s384] sm:$0xff]
        %v475 = vld [vmem:[%s384 + $0x8] sm:$0xff]
        %v476 = vld [vmem:[%s384 + $0x10] sm:$0xff]
        %v477 = vld [vmem:[%s384 + $0x18] sm:$0xff]
        %v478 = vld [vmem:[%s384 + $0x20] sm:$0xff]
        %v479 = vld [vmem:[%s384 + $0x28] sm:$0xff]
        %v480 = vld [vmem:[%s384 + $0x30] sm:$0xff]
        %v481 = vld [vmem:[%s384 + $0x38] sm:$0xff]
        %v482 = vld [vmem:[%s384 + $0x40] sm:$0xff]
        %v483 = vld [vmem:[%s384 + $0x48] sm:$0xff]
        %v484 = vld [vmem:[%s384 + $0x50] sm:$0xff]
        %v485 = vld [vmem:[%s384 + $0x58] sm:$0xff]
        %v486 = vld [vmem:[%s384 + $0x60] sm:$0xff]
        %v487 = vld [vmem:[%s384 + $0x68] sm:$0xff]
        %v488 = vld [vmem:[%s384 + $0x70] sm:$0xff]
        %v489 = vld [vmem:[%s384 + $0x78] sm:$0xff]
        %v490 = vld [vmem:[%s469] sm:$0xff]
        %v491 = vld [vmem:[%s7] sm:$0xf]
        %v492 = vld [vmem:[%s8] sm:$0x1]
        %vm493 = vcmask 64512
        %v495 = vsel %vm493, %v470, 0
        %497 = vmatprep.subr.mxu0 0.0
        %498 = vmatpush1.msra.mxu0 0.0
        %499 = vmatprep.subr.mxu0 0.0
        %500 = vmatpush1.msra.mxu0 0.0
        %501 = vmatprep.subr.mxu0 0.0
        %502 = vmatpush1.msra.mxu0 0.0
        %503 = vmatprep.subr.mxu0 0.0
        %504 = vmatpush1.msra.mxu0 0.0
        %505 = vmatprep.subr.mxu0 0.0
        %506 = vmatpush1.msra.mxu0 0.0
        %507 = vmatprep.subr.mxu0 0.0
        %508 = vmatpush1.msra.mxu0 0.0
        %509 = vmatprep.subr.mxu0 0.0
        %510 = vmatpush1.msra.mxu0 0.0
        %511 = vmatprep.subr.mxu0 0.0
        %512 = vmatpush1.msra.mxu0 0.0
        %513 = vmatprep.subr.mxu0 0.0
        %514 = vmatpush1.msra.mxu0 0.0
        %515 = vmatprep.subr.mxu0 0.0
        %516 = vmatpush1.msra.mxu0 0.0
        %517 = vmatprep.subr.mxu0 0.0
        %518 = vmatpush1.msra.mxu0 0.0
        %519 = vmatprep.subr.mxu0 0.0
        %520 = vmatpush1.msra.mxu0 0.0
        %521 = vmatprep.subr.mxu0 0.0
        %522 = vmatpush1.msra.mxu0 0.0
        %523 = vmatprep.subr.mxu0 0.0
        %524 = vmatpush1.msra.mxu0 0.0
        %525 = vmatprep.subr.mxu0 0.0
        %526 = vmatpush1.msra.mxu0 0.0
        %527 = vmatprep.subr.mxu0 0.0
        %528 = vmatpush1.msra.mxu0 %v472
        %529 = vmatprep.subr.mxu0 0.0
        %530 = vmatpush2.msra.mxu0 0.0
        %531 = vmatprep.subr.mxu0 0.0
        %532 = vmatpush2.msra.mxu0 0.0
        %533 = vmatprep.subr.mxu0 0.0
        %534 = vmatpush2.msra.mxu0 0.0
        %535 = vmatprep.subr.mxu0 0.0
        %536 = vmatpush2.msra.mxu0 0.0
        %537 = vmatprep.subr.mxu0 0.0
        %538 = vmatpush2.msra.mxu0 0.0
        %539 = vmatprep.subr.mxu0 0.0
        %540 = vmatpush2.msra.mxu0 0.0
        %541 = vmatprep.subr.mxu0 0.0
        %542 = vmatpush2.msra.mxu0 0.0
        %543 = vmatprep.subr.mxu0 0.0
        %544 = vmatpush2.msra.mxu0 0.0
        %545 = vmatprep.subr.mxu0 0.0
        %546 = vmatpush2.msra.mxu0 0.0
        %547 = vmatprep.subr.mxu0 0.0
        %548 = vmatpush2.msra.mxu0 0.0
        %549 = vmatprep.subr.mxu0 0.0
        %550 = vmatpush2.msra.mxu0 0.0
        %551 = vmatprep.subr.mxu0 0.0
        %552 = vmatpush2.msra.mxu0 0.0
        %553 = vmatprep.subr.mxu0 0.0
        %554 = vmatpush2.msra.mxu0 0.0
        %555 = vmatprep.subr.mxu0 0.0
        %556 = vmatpush2.msra.mxu0 0.0
        %557 = vmatprep.subr.mxu0 0.0
        %558 = vmatpush2.msra.mxu0 0.0
        %559 = vmatprep.subr.mxu0 0.0
        %560 = vmatpush2.msra.mxu0 0.0
        %561 = vmatprep.mubr.f32.mxu0 0.0
        %562 = vmatmul.mubr.f32.gmra.mxu0 %v495
        %v563 = vpop.f32.mrf.mxu0
        %v564 = vadd.f32 0.0, %v563
        %v565 = vpop.f32.mrf.mxu0
        %566 = vdwg.mxu0
        %v567 = vmul.f32 %v470, %v470
        %v568 = vsel %vm493, %v567, 0.0
        %569 = vadd.xlane.f32.xlu0 %v568
        %v570 = vpop.xlane.xlu0 %569
        %v571 = vmul.f32 %v472, %v472
        %v572 = vrot.slane %v571, 4
        %v573 = vadd.f32 %v571, %v572
        %v574 = vrot.slane %v573, 2
        %v575 = vadd.f32 %v573, %v574
        %v576 = vrot.slane %v575, 1
        %v577 = vadd.f32 %v575, %v576
        %v578 = vadd.f32 %v570, %v577
        %v579 = vmul.f32 %v564, 2.0
        %v580 = vsub.f32 %v578, %v579
        %v581 = vmax.f32 %v580, 0.0
        %582 = vset.pattern.permute.xlu0 0
        %583 = vperm.xlu0 %582, %v471
        %v584 = vpop.permute.xlu0 %583
        %v585 = vlaneseq
        %v586 = vshrl.u32 %v585, 7
        %v587 = vsub.s32 0, %v586
        %v588 = vrot.slane %v473, %v587
        %vm589 = vcmp.eq.s32.totalorder %v584, %v588
        %v590 = vsel %vm589, %v581, inf
        %591 = vmin.xlane.f32.xlu0 %v590
        %v592 = vpop.xlane.xlu0 %591
        %vm593 = vcmp.eq.f32.partialorder %v590, %v592
        %v594 = vsel %vm593, 1, 0
        %v595 = vcvt.s32.f32 %v594
        %596 = vadd.xlane.f32.xlu0 %v595
        %v597 = vpop.xlane.xlu0 %596
        %v598 = vadd.f32 %v592, 1e-16
        %v599 = vrcp.pop %v598
        %v600 = vmul.f32 1.0, %v599
        %v601 = vrcp.pop %v597
        %v602 = vmul.f32 %v600, %v601
        %v603 = vmul.f32 %v602, %v595
        %v604 = vadd.f32 %v603, 0.0
        %v605 = vadd.f32 %v600, 0.0
        %v606 = vsel %vm593, inf, %v590
        %607 = vmin.xlane.f32.xlu0 %v606
        %v608 = vpop.xlane.xlu0 %607
        %vm609 = vcmp.eq.f32.partialorder %v606, %v608
        %v610 = vsel %vm609, 1, 0
        %v611 = vcvt.s32.f32 %v610
        %612 = vadd.xlane.f32.xlu0 %v611
        %v613 = vpop.xlane.xlu0 %612
        %v614 = vadd.f32 %v608, 1e-16
        %v615 = vrcp.pop %v614
        %v616 = vmul.f32 1.0, %v615
        %v617 = vrcp.pop %v613
        %v618 = vmul.f32 %v616, %v617
        %v619 = vmul.f32 %v618, %v611
        %v620 = vadd.f32 %v604, %v619
        %v621 = vadd.f32 %v605, %v616
        %v622 = vsel %vm609, inf, %v606
        %623 = vmin.xlane.f32.xlu0 %v622
        %v624 = vpop.xlane.xlu0 %623
        %vm625 = vcmp.eq.f32.partialorder %v622, %v624
        %v626 = vsel %vm625, 1, 0
        %v627 = vcvt.s32.f32 %v626
        %628 = vadd.xlane.f32.xlu0 %v627
        %v629 = vpop.xlane.xlu0 %628
        %v630 = vadd.f32 %v624, 1e-16
        %v631 = vrcp.pop %v630
        %v632 = vmul.f32 1.0, %v631
        %v633 = vrcp.pop %v629
        %v634 = vmul.f32 %v632, %v633
        %v635 = vmul.f32 %v634, %v627
        %v636 = vadd.f32 %v620, %v635
        %v637 = vadd.f32 %v621, %v632
        %vm638 = vcmp.gt.f32.partialorder %v637, 0.0
        %v639 = vrcp.pop %v637
        %v640 = vmul.f32 1.0, %v639
        %v641 = vsel %vm638, %v640, 0.0
        %642 = vmatprep.subr.mxu0 0.0
        %643 = vmatpush1.msra.mxu0 %v489
        %644 = vmatprep.subr.mxu0 0.0
        %645 = vmatpush1.msra.mxu0 %v488
        %646 = vmatprep.subr.mxu0 0.0
        %647 = vmatpush1.msra.mxu0 %v487
        %648 = vmatprep.subr.mxu0 0.0
        %649 = vmatpush1.msra.mxu0 %v486
        %650 = vmatprep.subr.mxu0 0.0
        %651 = vmatpush1.msra.mxu0 %v485
        %652 = vmatprep.subr.mxu0 0.0
        %653 = vmatpush1.msra.mxu0 %v484
        %654 = vmatprep.subr.mxu0 0.0
        %655 = vmatpush1.msra.mxu0 %v483
        %656 = vmatprep.subr.mxu0 0.0
        %657 = vmatpush1.msra.mxu0 %v482
        %658 = vmatprep.subr.mxu0 0.0
        %659 = vmatpush1.msra.mxu0 %v481
        %660 = vmatprep.subr.mxu0 0.0
        %661 = vmatpush1.msra.mxu0 %v480
        %662 = vmatprep.subr.mxu0 0.0
        %663 = vmatpush1.msra.mxu0 %v479
        %664 = vmatprep.subr.mxu0 0.0
        %665 = vmatpush1.msra.mxu0 %v478
        %666 = vmatprep.subr.mxu0 0.0
        %667 = vmatpush1.msra.mxu0 %v477
        %668 = vmatprep.subr.mxu0 0.0
        %669 = vmatpush1.msra.mxu0 %v476
        %670 = vmatprep.subr.mxu0 0.0
        %671 = vmatpush1.msra.mxu0 %v475
        %672 = vmatprep.subr.mxu0 0.0
        %673 = vmatpush1.msra.mxu0 %v474
        %674 = vmatprep.subr.mxu0 0.0
        %675 = vmatpush2.msra.mxu0 0.0
        %676 = vmatprep.subr.mxu0 0.0
        %677 = vmatpush2.msra.mxu0 0.0
        %678 = vmatprep.subr.mxu0 0.0
        %679 = vmatpush2.msra.mxu0 0.0
        %680 = vmatprep.subr.mxu0 0.0
        %681 = vmatpush2.msra.mxu0 0.0
        %682 = vmatprep.subr.mxu0 0.0
        %683 = vmatpush2.msra.mxu0 0.0
        %684 = vmatprep.subr.mxu0 0.0
        %685 = vmatpush2.msra.mxu0 0.0
        %686 = vmatprep.subr.mxu0 0.0
        %687 = vmatpush2.msra.mxu0 0.0
        %688 = vmatprep.subr.mxu0 0.0
        %689 = vmatpush2.msra.mxu0 0.0
        %690 = vmatprep.subr.mxu0 0.0
        %691 = vmatpush2.msra.mxu0 0.0
        %692 = vmatprep.subr.mxu0 0.0
        %693 = vmatpush2.msra.mxu0 0.0
        %694 = vmatprep.subr.mxu0 0.0
        %695 = vmatpush2.msra.mxu0 0.0
        %696 = vmatprep.subr.mxu0 0.0
        %697 = vmatpush2.msra.mxu0 0.0
        %698 = vmatprep.subr.mxu0 0.0
        %699 = vmatpush2.msra.mxu0 0.0
        %700 = vmatprep.subr.mxu0 0.0
        %701 = vmatpush2.msra.mxu0 0.0
        %702 = vmatprep.subr.mxu0 0.0
        %703 = vmatpush2.msra.mxu0 0.0
        %704 = vmatprep.subr.mxu0 0.0
        %705 = vmatpush2.msra.mxu0 0.0
        %706 = vmatprep.mubr.f32.mxu0 0.0
        %707 = vmatmul.mubr.f32.gmra.mxu0 %v636
        %v708 = vpop.f32.mrf.mxu0
        %v709 = vadd.f32 0.0, %v708
        %v710 = vpop.f32.mrf.mxu0
        %711 = vdwg.mxu0
        %v712 = vmul.f32 %v709, %v641
        %vm713 = vcmask 31744
        %v715 = vsel %vm713, %v490, 0
        %vm717 = vcmask 1043456
        %v719 = vsel %vm717, %v491, 0
        %721 = vmatprep.subr.mxu0 0.0
        %722 = vmatpush1.msra.mxu0 0.0
        %723 = vmatprep.subr.mxu0 0.0
        %724 = vmatpush1.msra.mxu0 0.0
        %725 = vmatprep.subr.mxu0 0.0
        %726 = vmatpush1.msra.mxu0 0.0
        %727 = vmatprep.subr.mxu0 0.0
        %728 = vmatpush1.msra.mxu0 0.0
        %729 = vmatprep.subr.mxu0 0.0
        %730 = vmatpush1.msra.mxu0 0.0
        %731 = vmatprep.subr.mxu0 0.0
        %732 = vmatpush1.msra.mxu0 0.0
        %733 = vmatprep.subr.mxu0 0.0
        %734 = vmatpush1.msra.mxu0 0.0
        %735 = vmatprep.subr.mxu0 0.0
        %736 = vmatpush1.msra.mxu0 0.0
        %737 = vmatprep.subr.mxu0 0.0
        %738 = vmatpush1.msra.mxu0 0.0
        %739 = vmatprep.subr.mxu0 0.0
        %740 = vmatpush1.msra.mxu0 0.0
        %741 = vmatprep.subr.mxu0 0.0
        %742 = vmatpush1.msra.mxu0 0.0
        %743 = vmatprep.subr.mxu0 0.0
        %744 = vmatpush1.msra.mxu0 0.0
        %745 = vmatprep.subr.mxu0 0.0
        %746 = vmatpush1.msra.mxu0 0.0
        %747 = vmatprep.subr.mxu0 0.0
        %748 = vmatpush1.msra.mxu0 0.0
        %749 = vmatprep.subr.mxu0 0.0
        %750 = vmatpush1.msra.mxu0 0.0
        %751 = vmatprep.subr.mxu0 0.0
        %752 = vmatpush1.msra.mxu0 %v719
        %753 = vmatprep.subr.mxu0 0.0
        %754 = vmatpush2.msra.mxu0 0.0
        %755 = vmatprep.subr.mxu0 0.0
        %756 = vmatpush2.msra.mxu0 0.0
        %757 = vmatprep.subr.mxu0 0.0
        %758 = vmatpush2.msra.mxu0 0.0
        %759 = vmatprep.subr.mxu0 0.0
        %760 = vmatpush2.msra.mxu0 0.0
        %761 = vmatprep.subr.mxu0 0.0
        %762 = vmatpush2.msra.mxu0 0.0
        %763 = vmatprep.subr.mxu0 0.0
        %764 = vmatpush2.msra.mxu0 0.0
        %765 = vmatprep.subr.mxu0 0.0
        %766 = vmatpush2.msra.mxu0 0.0
        %767 = vmatprep.subr.mxu0 0.0
        %768 = vmatpush2.msra.mxu0 0.0
        %769 = vmatprep.subr.mxu0 0.0
        %770 = vmatpush2.msra.mxu0 0.0
        %771 = vmatprep.subr.mxu0 0.0
        %772 = vmatpush2.msra.mxu0 0.0
        %773 = vmatprep.subr.mxu0 0.0
        %774 = vmatpush2.msra.mxu0 0.0
        %775 = vmatprep.subr.mxu0 0.0
        %776 = vmatpush2.msra.mxu0 0.0
        %777 = vmatprep.subr.mxu0 0.0
        %778 = vmatpush2.msra.mxu0 0.0
        %779 = vmatprep.subr.mxu0 0.0
        %780 = vmatpush2.msra.mxu0 0.0
        %781 = vmatprep.subr.mxu0 0.0
        %782 = vmatpush2.msra.mxu0 0.0
        %783 = vmatprep.subr.mxu0 0.0
        %784 = vmatpush2.msra.mxu0 0.0
        %785 = vmatprep.mubr.f32.mxu0 0.0
        %786 = vmatmul.mubr.f32.gmra.mxu0 %v715
        %v787 = vpop.f32.mrf.mxu0
        %v788 = vadd.f32 0.0, %v787
        %v789 = vpop.f32.mrf.mxu0
        %790 = vdwg.mxu0
        %v791 = vadd.f32 %v712, %v788
        %v793 = vlaneseq
        %v794 = vshrl.u32 %v793, 7
        %v795 = vsub.s32 0, %v794
        %v796 = vrot.slane %v492, %v795
        %v798 = vadd.f32 %v791, %v796
        %v799 = vmax.f32 %v798, 0.0
        %800 = vst [vmem:[%s437] sm:$0xff] %v799
        %vm801 = vcmp.ge.s32.totalorder %v471, 0
        %v802 = vsel %vm801, 1, 0
        %v803 = vcvt.s32.f32 %v802
        %805 = vset.pattern.permute.xlu0 0
        %806 = vperm.xlu0 %805, %v803
        %v807 = vpop.permute.xlu0 %806
        %v809 = vmul.f32 %v799, %v807
        %v810 = vrot.slane %v809, 4
        %v811 = vadd.f32 %v809, %v810
        %v812 = vrot.slane %v811, 2
        %v813 = vadd.f32 %v811, %v812
        %v814 = vrot.slane %v813, 1
        %v815 = vadd.f32 %v813, %v814
        %816 = vst [vmem:[%s444] sm:$0x1] %v815
        %v817 = vmul.f32 %v809, %v809
        %v818 = vrot.slane %v817, 4
        %v819 = vadd.f32 %v817, %v818
        %v820 = vrot.slane %v819, 2
        %v821 = vadd.f32 %v819, %v820
        %v822 = vrot.slane %v821, 1
        %v823 = vadd.f32 %v821, %v822
        %824 = vst [vmem:[%s444 + $0x1] sm:$0x1] %v823
        %s825 = sand.u32 %s249, 1
        %s826 = scalar_lea.sflag [#allocation6], %s825
        %s827 = sand.u32 %s249, 1
        %s828 = smul.addr %s827, 8
        %s829 = scalar_lea.vmem [#allocation7], %s828
        %s830 = sand.u32 %s275, 1
        %s831 = scalar_lea.sflag [#allocation9], %s830
        %s832 = sand.u32 %s275, 1
        %s833 = smul.addr %s832, 8
        %s834 = scalar_lea.vmem [#allocation8], %s833
        // Predicated region
        $region57: #{tpu_custom_call.1} parent=51 // pred_check
          %p835 = pneg %p259
        $region58: #{tpu_custom_call.1} parent=51 // pred_check_branch
          %837 = sbr.rel (%p835) target = $region60
        $region59: #{tpu_custom_call.1} parent=51 // pred_region
          %s839 = ssub.s32 128, 128
          %840 = vsyncadd %s826, %s839
          %s841 = smul.addr %s37, 128
          %s842 = scalar_lea.hbm %s9, %s841
          %s844 = sshll.u32 %s829, 4
          %s845 = int_to_ptr.vmem [resolvable:$true] %s844
          %847 = dma.vmem_to_hbm [thread:$0]  %s845, 128, %s842, %s826
        $region60: #{tpu_custom_call.1} parent=51 // pred_fallthru
          _
        // Predicated region
        $region61: #{tpu_custom_call.1} parent=51 // pred_check
          %p848 = pneg %p285
        $region62: #{tpu_custom_call.1} parent=51 // pred_check_branch
          %850 = sbr.rel (%p848) target = $region64
        $region63: #{tpu_custom_call.1} parent=51 // pred_region
          %s852 = ssub.s32 128, 128
          %853 = vsyncadd %s831, %s852
          %s854 = smul.addr %s37, 128
          %s855 = scalar_lea.hbm %s10, %s854
          %s857 = sshll.u32 %s834, 4
          %s858 = int_to_ptr.vmem [resolvable:$true] %s857
          %860 = dma.vmem_to_hbm [thread:$0]  %s858, 128, %s855, %s831
        $region64: #{tpu_custom_call.1} parent=51 // pred_fallthru
          _
      $region52: #{tpu_custom_call.1} parent=5 // pred_fallthru
        _
      %p861 = scmp.le.s32.totalorder 2, %s32
      // Predicated region
      $region65: #{tpu_custom_call.1} parent=5 // pred_check
        %p862 = pneg %p861
      $region66: #{tpu_custom_call.1} parent=5 // pred_check_branch
        %864 = sbr.rel (%p862) target = $region68
      $region67: #{tpu_custom_call.1} parent=5 // pred_region
        %s865 = ssub.s32 %s32, 2
        // Predicated region
        $region69: #{tpu_custom_call.1} parent=67 // pred_check
          %p866 = pneg %p265
        $region70: #{tpu_custom_call.1} parent=67 // pred_check_branch
          %868 = sbr.rel (%p866) target = $region72
        $region71: #{tpu_custom_call.1} parent=67 // pred_region
          %s869 = sand.u32 %s250, 1
          %s870 = scalar_lea.sflag [#allocation6], %s869
          %s871 = sand.u32 %s250, 1
          %s872 = smul.addr %s871, 8
          %s873 = scalar_lea.vmem [#allocation7], %s872
          %874 = dma.done %s870, 128
        $region72: #{tpu_custom_call.1} parent=67 // pred_fallthru
          _
        // Predicated region
        $region73: #{tpu_custom_call.1} parent=67 // pred_check
          %p875 = pneg %p291
        $region74: #{tpu_custom_call.1} parent=67 // pred_check_branch
          %877 = sbr.rel (%p875) target = $region76
        $region75: #{tpu_custom_call.1} parent=67 // pred_region
          %s878 = sand.u32 %s276, 1
          %s879 = scalar_lea.sflag [#allocation9], %s878
          %s880 = sand.u32 %s276, 1
          %s881 = smul.addr %s880, 8
          %s882 = scalar_lea.vmem [#allocation8], %s881
          %883 = dma.done %s879, 128
        $region76: #{tpu_custom_call.1} parent=67 // pred_fallthru
          _
      $region68: #{tpu_custom_call.1} parent=5 // pred_fallthru
        _
    $region6: #{tpu_custom_call.1} parent=1 // loop_footer
      %s36 = sadd.s32 1, %s32
    $region7: #{tpu_custom_call.1} parent=1 // loop_footer_branch
      %31 = sbr.rel target = $region3
    $region8: #{tpu_custom_call.1} parent=1 // loop_exit
      _
    %884 = vsyncpa [#allocation5], 1
    %s885 = scalar_lea.sflag [#allocation5], 1
    %886 = vsyncpa %s885, 1
    %887 = vsyncpa [#allocation6], 1
    %s888 = scalar_lea.sflag [#allocation6], 1
    %889 = vsyncpa %s888, 1
    %890 = vsyncpa [#allocation9], 1
    %s891 = scalar_lea.sflag [#allocation9], 1
    %892 = vsyncpa %s891, 1

</llo_original>
